<compile_context>
chip_gen: v7x
topology: tpu7x:2x2x1
jax: 0.10.0
libtpu: 0.0.40
codegen_flags: <defaults>
</compile_context>

<pallas_src>
import jax
import jax.numpy as jnp
from jax.experimental import pallas as pl
from jax.experimental.pallas import tpu as pltpu


def _normal_loss_kernel(fake_ref, real_ref, acc_ref):
    """Accumulate per-lane partial sums of f*r, f*f, r*r over masked tiles."""
    @pl.when(pl.program_id(0) == 0)
    def _():
        acc_ref[...] = jnp.zeros_like(acc_ref)

    fake = fake_ref[...]
    real = real_ref[...]

    # Mask once per operand (zero where grad_real is NaN), upcast per-tile so
    # bf16 inputs accumulate in f32, then three muls + a row reduction into
    # the tiny resident (3, lane) accumulator.  No row-validity / iota mask:
    # every tile the grid touches is a full, valid tile.
    keep = jnp.logical_not(jnp.isnan(real))
    mf = jnp.where(keep, fake, 0).astype(jnp.float32)
    mr = jnp.where(keep, real, 0).astype(jnp.float32)

    acc_ref[0:1, :] += jnp.sum(mf * mr, axis=0, keepdims=True)
    acc_ref[1:2, :] += jnp.sum(mf * mf, axis=0, keepdims=True)
    acc_ref[2:3, :] += jnp.sum(mr * mr, axis=0, keepdims=True)


def _masked_partial_sums(fake, real):
    """Plain-JAX partial sums for the ragged remainder (< one tile of work)."""
    keep = jnp.logical_not(jnp.isnan(real))
    mf = jnp.where(keep, fake, 0).astype(jnp.float32)
    mr = jnp.where(keep, real, 0).astype(jnp.float32)
    return jnp.sum(mf * mr), jnp.sum(mf * mf), jnp.sum(mr * mr)


def _default_tile_bytes():
    """Per-input tile bytes, sized per TPU generation (HBM BW vs step overhead)."""
    try:
        kind = jax.devices()[0].device_kind.lower()
    except Exception:
        kind = ""
    if "v7" in kind:
        return 6 << 20   # 3.2 TB/s HBM, 64 MiB VMEM -> bigger tiles, bounded budget
    if "v6" in kind:
        return 4 << 20   # 1.4 TB/s HBM, 128 MiB VMEM
    return 2 << 20       # v5e and older: already >=93% amortized at 0.82 TB/s


def _vmem_limit_bytes(tile_bytes):
    try:
        cap = int(pltpu.get_tpu_info().vmem_capacity_bytes)
    except Exception:
        cap = 64 << 20   # conservative (v7x physical VMEM)
    # 2 inputs x 2 pipeline buffers x tile + f32 intermediates + slack,
    # capped below the physical capacity.
    return int(min(max(10 * tile_bytes, 32 << 20), (cap * 7) // 8))


def normal_loss(grad_fake, grad_real, *, lane=512, tile_bytes=None):
    """1 - global NaN-masked cosine similarity  ==  NormalLoss.forward."""
    assert grad_fake.shape == grad_real.shape
    assert lane % 128 == 0 and lane >= 128

    if tile_bytes is None:
        tile_bytes = _default_tile_bytes()

    f_flat = grad_fake.reshape(-1)   # no dtype cast, no jnp.pad
    r_flat = grad_real.reshape(-1)
    total = f_flat.shape[0]
    itemsize = jnp.dtype(grad_fake.dtype).itemsize

    # Widest lane (<= requested) that divides the element count, so the 2-D
    # view below is copy-free whenever possible.
    lane_eff = lane
    for cand in (lane, 512, 256, 128):
        if cand <= lane and total % cand == 0:
            lane_eff = cand
            break
    n_rows = total // lane_eff

    # Row-block scaled so rb * lane_eff * itemsize ~= tile_bytes regardless of
    # which lane width was picked (constant per-step amortization), clamped to
    # the available rows (multiple of 8).
    rb = max(8, (tile_bytes // (lane_eff * itemsize)) // 8 * 8)
    rb = min(rb, (n_rows // 8) * 8)   # 0 for tiny inputs -> all-JAX fallback

    prod = jnp.float32(0.0)
    f2 = jnp.float32(0.0)
    r2 = jnp.float32(0.0)
    kernel_end = 0

    if rb >= 8:
        n_full = n_rows // rb            # grid covers only FULL row-blocks
        kernel_rows = n_full * rb
        kernel_end = kernel_rows * lane_eff

        body = n_rows * lane_eff
        f_body = f_flat if body == total else f_flat[:body]
        r_body = r_flat if body == total else r_flat[:body]
        f2d = f_body.reshape(n_rows, lane_eff)
        r2d = r_body.reshape(n_rows, lane_eff)

        real_tile_bytes = rb * lane_eff * itemsize
        vmem_limit = _vmem_limit_bytes(real_tile_bytes)

        acc = pl.pallas_call(
            _normal_loss_kernel,
            out_shape=jax.ShapeDtypeStruct((3, lane_eff), jnp.float32),
            grid_spec=pltpu.PrefetchScalarGridSpec(
                num_scalar_prefetch=0,
                grid=(n_full,),
                in_specs=[
                    pl.BlockSpec((rb, lane_eff), lambda i: (i, 0)),
                    pl.BlockSpec((rb, lane_eff), lambda i: (i, 0)),
                ],
                out_specs=pl.BlockSpec((3, lane_eff), lambda i: (0, 0)),
            ),
            compiler_params=pltpu.CompilerParams(
                dimension_semantics=("arbitrary",),
                vmem_limit_bytes=vmem_limit),
            cost_estimate=pl.CostEstimate(
                flops=8 * kernel_end,
                transcendentals=0,
                bytes_accessed=2 * kernel_end * itemsize + 3 * lane_eff * 4),
        )(f2d, r2d)

        sums = jnp.sum(acc, axis=1)      # combine per-lane partials
        prod, f2, r2 = sums[0], sums[1], sums[2]

    if kernel_end < total:
        # Ragged remainder (last partial row-block + sub-lane tail): at most
        # ~one tile of elements, reduced in plain JAX.
        tp, tf2, tr2 = _masked_partial_sums(f_flat[kernel_end:], r_flat[kernel_end:])
        prod = prod + tp
        f2 = f2 + tf2
        r2 = r2 + tr2

    return 1.0 - prod / (jnp.sqrt(f2) * jnp.sqrt(r2))


def _normal_loss_ref(grad_fake, grad_real):
    """Plain-JAX reference reproducing the (degenerate) PyTorch semantics."""
    f = grad_fake.astype(jnp.float32)
    r = grad_real.astype(jnp.float32)
    keep = jnp.logical_not(jnp.isnan(r))
    zero = jnp.zeros_like(r)
    prod = jnp.sum(jnp.where(keep, f * r, zero))
    fake_norm = jnp.sqrt(jnp.sum(jnp.where(keep, f * f, zero)))
    real_norm = jnp.sqrt(jnp.sum(jnp.where(keep, r * r, zero)))
    return 1.0 - prod / (fake_norm * real_norm)


if __name__ == "__main__":
    key = jax.random.PRNGKey(0)
    k_fake, k_real, k_nan = jax.random.split(key, 3)

    def make_inputs(shape, dtype=jnp.float32, nan_frac=0.15):
        gf = jax.random.normal(k_fake, shape, dtype=jnp.float32).astype(dtype)
        gr = jax.random.normal(k_real, shape, dtype=jnp.float32).astype(dtype)
        nan_mask = jax.random.uniform(k_nan, shape) < nan_frac
        gr = jnp.where(nan_mask, jnp.nan, gr)
        return gf, gr

    # 1) Ragged shape (partial last row-block AND sub-lane tail): kernel path
    #    plus the JAX-side remainder.
    gf, gr = make_inputs((2, 21, 32))                        # 1344 elements
    ref = _normal_loss_ref(gf, gr)
    out = jax.block_until_ready(normal_loss(gf, gr, lane=128, tile_bytes=8 * 128 * 4))
    assert jnp.isfinite(out), f"non-finite loss: {out}"
    assert jnp.abs(out - ref) < 1e-5, f"mismatch: {out} vs {ref}"

    # 2) Same data through the production defaults (tiny input -> all-JAX
    #    fallback path).
    out = jax.block_until_ready(normal_loss(gf, gr))
    assert jnp.abs(out - ref) < 1e-5, f"mismatch: {out} vs {ref}"

    # 3) Evenly dividing shape, multi-step grid, no remainder.
    gf, gr = make_inputs((2, 32, 32))                        # 2048 elements
    ref = _normal_loss_ref(gf, gr)
    out = jax.block_until_ready(normal_loss(gf, gr, lane=128, tile_bytes=8 * 128 * 4))
    assert jnp.abs(out - ref) < 1e-5, f"mismatch: {out} vs {ref}"

    # 4) Default (generation-aware) tiling with the kernel path engaged.
    gf, gr = make_inputs((4, 128, 128))                      # 65536 elements
    ref = _normal_loss_ref(gf, gr)
    out = jax.block_until_ready(normal_loss(gf, gr))
    assert jnp.abs(out - ref) < 1e-5, f"mismatch: {out} vs {ref}"

    # 5) bf16 inputs (in-kernel f32 accumulation).
    gf, gr = make_inputs((2, 64, 128), dtype=jnp.bfloat16)   # 16384 elements
    ref = _normal_loss_ref(gf, gr)
    out = jax.block_until_ready(normal_loss(gf, gr))
    assert jnp.abs(out - ref) < 1e-4, f"mismatch: {out} vs {ref}"

    print("KERNEL_OK")
</pallas_src>

<mosaic_0001>
module attributes {stable_mosaic.version = 11 : i64} {
  func.func @_normal_loss_kernel(%arg0: i32, %arg1: memref<8x128xf32, #tpu.memory_space<vmem>>, %arg2: memref<8x128xf32, #tpu.memory_space<vmem>>, %arg3: memref<3x128xf32, #tpu.memory_space<vmem>>) attributes {dimension_semantics = [#tpu.dimension_semantics<arbitrary>], iteration_bounds = array<i64: 1>, scalar_prefetch = 0 : i64, scratch_operands = 0 : i64, tpu.core_type = #tpu.core_type<tc>, window_params = [{transform_indices = @transform_0, window_bounds = array<i64: 8, 128>}, {transform_indices = @transform_1, window_bounds = array<i64: 8, 128>}, {pipeline_mode = #tpu.pipeline_mode<synchronous>, transform_indices = @transform_2, window_bounds = array<i64: 3, 128>}]} {
    %c0_i32 = arith.constant 0 : i32
    %0 = arith.cmpi eq, %arg0, %c0_i32 : i32
    %1 = arith.extui %0 : i1 to i32
    %c0_i32_0 = arith.constant 0 : i32
    %2 = arith.cmpi ne, %1, %c0_i32_0 : i32
    scf.if %2 {
      %cst_19 = arith.constant 0.000000e+00 : f32
      %31 = vector.broadcast %cst_19 : f32 to vector<3x128xf32>
      %c0_20 = arith.constant 0 : index
      %c0_21 = arith.constant 0 : index
      %32 = vector.load %arg3[%c0_20, %c0_21] : memref<3x128xf32, #tpu.memory_space<vmem>>, vector<3x128xf32>
      tpu.vector_store %arg3[%c0_20, %c0_21], %31 {strides = array<i32>} : memref<3x128xf32, #tpu.memory_space<vmem>>, vector<3x128xf32>,
    } else {
    }
    %c0 = arith.constant 0 : index
    %c0_1 = arith.constant 0 : index
    %3 = vector.load %arg1[%c0, %c0_1] : memref<8x128xf32, #tpu.memory_space<vmem>>, vector<8x128xf32>
    %c0_2 = arith.constant 0 : index
    %c0_3 = arith.constant 0 : index
    %4 = vector.load %arg2[%c0_2, %c0_3] : memref<8x128xf32, #tpu.memory_space<vmem>>, vector<8x128xf32>
    %5 = arith.cmpf one, %4, %4 : vector<8x128xf32>
    %cst = arith.constant dense<true> : vector<8x128xi1>
    %6 = arith.xori %5, %cst : vector<8x128xi1>
    %c0_i32_4 = arith.constant 0 : i32
    %7 = arith.sitofp %c0_i32_4 : i32 to f32
    %8 = vector.broadcast %7 : f32 to vector<8x128xf32>
    %9 = arith.select %6, %3, %8 : vector<8x128xi1>, vector<8x128xf32>
    %c0_i32_5 = arith.constant 0 : i32
    %10 = arith.sitofp %c0_i32_5 : i32 to f32
    %11 = vector.broadcast %10 : f32 to vector<8x128xf32>
    %12 = arith.select %6, %4, %11 : vector<8x128xi1>, vector<8x128xf32>
    %c0_6 = arith.constant 0 : index
    %c0_7 = arith.constant 0 : index
    %13 = vector.load %arg3[%c0_6, %c0_7] : memref<3x128xf32, #tpu.memory_space<vmem>>, vector<1x128xf32>
    %14 = arith.mulf %9, %12 : vector<8x128xf32>
    %cst_8 = arith.constant dense<0.000000e+00> : vector<128xf32>
    %15 = vector.multi_reduction <add>, %14, %cst_8 [0] : vector<8x128xf32> to vector<128xf32>
    %16 = vector.shape_cast %15 : vector<128xf32> to vector<1x128xf32>
    %17 = arith.addf %13, %16 : vector<1x128xf32>
    %c0_9 = arith.constant 0 : index
    %c0_10 = arith.constant 0 : index
    %18 = vector.load %arg3[%c0_9, %c0_10] : memref<3x128xf32, #tpu.memory_space<vmem>>, vector<1x128xf32>
    tpu.vector_store %arg3[%c0_9, %c0_10], %17 {strides = array<i32>} : memref<3x128xf32, #tpu.memory_space<vmem>>, vector<1x128xf32>,
    %c1 = arith.constant 1 : index
    %c0_11 = arith.constant 0 : index
    %19 = vector.load %arg3[%c1, %c0_11] : memref<3x128xf32, #tpu.memory_space<vmem>>, vector<1x128xf32>
    %20 = arith.mulf %9, %9 : vector<8x128xf32>
    %cst_12 = arith.constant dense<0.000000e+00> : vector<128xf32>
    %21 = vector.multi_reduction <add>, %20, %cst_12 [0] : vector<8x128xf32> to vector<128xf32>
    %22 = vector.shape_cast %21 : vector<128xf32> to vector<1x128xf32>
    %23 = arith.addf %19, %22 : vector<1x128xf32>
    %c1_13 = arith.constant 1 : index
    %c0_14 = arith.constant 0 : index
    %24 = vector.load %arg3[%c1_13, %c0_14] : memref<3x128xf32, #tpu.memory_space<vmem>>, vector<1x128xf32>
    tpu.vector_store %arg3[%c1_13, %c0_14], %23 {strides = array<i32>} : memref<3x128xf32, #tpu.memory_space<vmem>>, vector<1x128xf32>,
    %c2 = arith.constant 2 : index
    %c0_15 = arith.constant 0 : index
    %25 = vector.load %arg3[%c2, %c0_15] : memref<3x128xf32, #tpu.memory_space<vmem>>, vector<1x128xf32>
    %26 = arith.mulf %12, %12 : vector<8x128xf32>
    %cst_16 = arith.constant dense<0.000000e+00> : vector<128xf32>
    %27 = vector.multi_reduction <add>, %26, %cst_16 [0] : vector<8x128xf32> to vector<128xf32>
    %28 = vector.shape_cast %27 : vector<128xf32> to vector<1x128xf32>
    %29 = arith.addf %25, %28 : vector<1x128xf32>
    %c2_17 = arith.constant 2 : index
    %c0_18 = arith.constant 0 : index
    %30 = vector.load %arg3[%c2_17, %c0_18] : memref<3x128xf32, #tpu.memory_space<vmem>>, vector<1x128xf32>
    tpu.vector_store %arg3[%c2_17, %c0_18], %29 {strides = array<i32>} : memref<3x128xf32, #tpu.memory_space<vmem>>, vector<1x128xf32>,
    return
  }
  func.func @transform_0(%arg0: i32) -> (i32, i32) {
    %c0_i32 = arith.constant 0 : i32
    %c0_i32_0 = arith.constant 0 : i32
    return %arg0, %c0_i32 : i32, i32
  }
  func.func @transform_1(%arg0: i32) -> (i32, i32) {
    %c0_i32 = arith.constant 0 : i32
    %c0_i32_0 = arith.constant 0 : i32
    return %arg0, %c0_i32 : i32, i32
  }
  func.func @transform_2(%arg0: i32) -> (i32, i32) {
    %c0_i32 = arith.constant 0 : i32
    %c0_i32_0 = arith.constant 0 : i32
    %c0_i32_1 = arith.constant 0 : i32
    return %c0_i32, %c0_i32_0 : i32, i32
  }
}

</mosaic_0001>

<llo_original>
// kernel: tpu_custom_call.1
$region0: #{tpu_custom_call.1}
  #allocation0 [shape = 'u32[]', space=smem, size = 0x4, offset = 0x4, fixed_abs, tag = 'smem constant byte address 0x4 - core index']
  #allocation1 [shape = 'u32[144,128]{1,0:T(1,128)}', space=vmem, size = 0x12000, scoped, tag = 'internal scratch']
  %s0 = inlined_call_operand.hbm [shape: f32[10,128], index: 0, kind: input, shape index: {}]
  %s1 = inlined_call_operand.hbm [shape: f32[10,128], index: 1, kind: input, shape index: {}]
  %s2 = inlined_call_operand.hbm [shape: f32[3,128], index: 2, kind: output, shape index: {}]
  %s3 = sld [smem:[#allocation0]]
  $region30: #{tpu_custom_call.1} parent=0
    _
  %s5 = ssub.s32 1, %s3
  %s6 = scalar_select 0, %s5, %s3
  $region1: #{tpu_custom_call.1} parent=0
    #allocation2 [shape = 'u8[4096]{0}', space=vmem, size = 0x1000, scoped, tag = 'input window, operand 0, single buffered']
    #allocation3 [shape = 's32[1]{0}', space=sflag, size = 0x4, scoped, tag = 'scoped memory for tpu_custom_call.1']
    #allocation4 [shape = 's32[1]{0}', space=sflag, size = 0x4, scoped, tag = 'scoped memory for tpu_custom_call.1']
    #allocation5 [shape = 'u8[4096]{0}', space=vmem, size = 0x1000, scoped, tag = 'input window, operand 1, single buffered']
    #allocation6 [shape = 's32[1]{0}', space=sflag, size = 0x4, scoped, tag = 'scoped memory for tpu_custom_call.1']
    #allocation7 [shape = 'u8[2048]{0}', space=vmem, size = 0x800, scoped, tag = 'output window, operand 0, single buffered']
    %7 = vsyncpa [#allocation3], 0
    %8 = vsyncpa [#allocation6], 0
    %9 = vsyncpa [#allocation4], 0
    // Predicated region
    $region2: #{tpu_custom_call.1} parent=1 // pred_check
      _
    $region3: #{tpu_custom_call.1} parent=1 // pred_check_branch
      %11 = sbr.rel (0) target = $region5
    $region4: #{tpu_custom_call.1} parent=1 // pred_region
      %s13 = ssub.s32 128, 128
      %14 = vsyncadd [#allocation3], %s13
      %s16 = sshll.u32 [#allocation2], 4
      %s17 = int_to_ptr.vmem [resolvable:$true] %s16
      %19 = dma.hbm_to_vmem [thread:$0]  %s0, 128, %s17, [#allocation3]
    $region5: #{tpu_custom_call.1} parent=1 // pred_fallthru
      _
    // Predicated region
    $region6: #{tpu_custom_call.1} parent=1 // pred_check
      _
    $region7: #{tpu_custom_call.1} parent=1 // pred_check_branch
      %21 = sbr.rel (0) target = $region9
    $region8: #{tpu_custom_call.1} parent=1 // pred_region
      %s23 = ssub.s32 128, 128
      %24 = vsyncadd [#allocation6], %s23
      %s26 = sshll.u32 [#allocation5], 4
      %s27 = int_to_ptr.vmem [resolvable:$true] %s26
      %29 = dma.hbm_to_vmem [thread:$0]  %s1, 128, %s27, [#allocation6]
    $region9: #{tpu_custom_call.1} parent=1 // pred_fallthru
      _
    // Predicated region
    $region10: #{tpu_custom_call.1} parent=1 // pred_check
      _
    $region11: #{tpu_custom_call.1} parent=1 // pred_check_branch
      %31 = sbr.rel (0) target = $region13
    $region12: #{tpu_custom_call.1} parent=1 // pred_region
      %32 = dma.done [#allocation3], 128
    $region13: #{tpu_custom_call.1} parent=1 // pred_fallthru
      _
    // Predicated region
    $region14: #{tpu_custom_call.1} parent=1 // pred_check
      _
    $region15: #{tpu_custom_call.1} parent=1 // pred_check_branch
      %34 = sbr.rel (0) target = $region17
    $region16: #{tpu_custom_call.1} parent=1 // pred_region
      %35 = dma.done [#allocation6], 128
    $region17: #{tpu_custom_call.1} parent=1 // pred_fallthru
      _
    %p36 = scmp.eq.s32.totalorder 0, 0
    // Predicated region
    $region18: #{tpu_custom_call.1} parent=1 // pred_check
      %p37 = pneg %p36
    $region19: #{tpu_custom_call.1} parent=1 // pred_check_branch
      %39 = sbr.rel (%p37) target = $region21
    $region20: #{tpu_custom_call.1} parent=1 // pred_region
      %40 = vst [vmem:[#allocation7] sm:$0x7] 0.0
    $region21: #{tpu_custom_call.1} parent=1 // pred_fallthru
      _
    %v41 = vld [vmem:[#allocation2] sm:$0xff]
    %v42 = vld [vmem:[#allocation5] sm:$0xff]
    %vm43 = vcmp.ne.f32.partialorder %v42, %v42
    %vm44 = vmxor %vm43, 1
    %v45 = vsel %vm44, %v41, 0.0
    %v46 = vsel %vm44, %v42, 0.0
    %v47 = vld [vmem:[#allocation7] sm:$0x1]
    %v48 = vmul.f32 %v45, %v46
    %v49 = vrot.slane %v48, 4
    %v50 = vadd.f32 %v48, %v49
    %v51 = vrot.slane %v50, 2
    %v52 = vadd.f32 %v50, %v51
    %v53 = vrot.slane %v52, 1
    %v54 = vadd.f32 %v52, %v53
    %v55 = vadd.f32 %v47, %v54
    %56 = vst [vmem:[#allocation7] sm:$0x1] %v55
    %v57 = vld [vmem:[#allocation7 + $0x1] sm:$0x1]
    %v58 = vmul.f32 %v45, %v45
    %v59 = vrot.slane %v58, 4
    %v60 = vadd.f32 %v58, %v59
    %v61 = vrot.slane %v60, 2
    %v62 = vadd.f32 %v60, %v61
    %v63 = vrot.slane %v62, 1
    %v64 = vadd.f32 %v62, %v63
    %v65 = vadd.f32 %v57, %v64
    %66 = vst [vmem:[#allocation7 + $0x1] sm:$0x1] %v65
    %v67 = vld [vmem:[#allocation7 + $0x2] sm:$0x1]
    %v68 = vmul.f32 %v46, %v46
    %v69 = vrot.slane %v68, 4
    %v70 = vadd.f32 %v68, %v69
    %v71 = vrot.slane %v70, 2
    %v72 = vadd.f32 %v70, %v71
    %v73 = vrot.slane %v72, 1
    %v74 = vadd.f32 %v72, %v73
    %v75 = vadd.f32 %v67, %v74
    %76 = vst [vmem:[#allocation7 + $0x2] sm:$0x1] %v75
    // Predicated region
    $region22: #{tpu_custom_call.1} parent=1 // pred_check
      _
    $region23: #{tpu_custom_call.1} parent=1 // pred_check_branch
      %78 = sbr.rel (0) target = $region25
    $region24: #{tpu_custom_call.1} parent=1 // pred_region
      %s80 = ssub.s32 64, 64
      %81 = vsyncadd [#allocation4], %s80
      %s83 = sshll.u32 [#allocation7], 4
      %s84 = int_to_ptr.vmem [resolvable:$true] %s83
      %86 = dma.vmem_to_hbm [thread:$0]  %s84, 64, %s2, [#allocation4]
    $region25: #{tpu_custom_call.1} parent=1 // pred_fallthru
      _
    // Predicated region
    $region26: #{tpu_custom_call.1} parent=1 // pred_check
      _
    $region27: #{tpu_custom_call.1} parent=1 // pred_check_branch
      %88 = sbr.rel (0) target = $region29
    $region28: #{tpu_custom_call.1} parent=1 // pred_region
      %89 = dma.done [#allocation4], 64
    $region29: #{tpu_custom_call.1} parent=1 // pred_fallthru
      _
    %90 = vsyncpa [#allocation3], 1
    %91 = vsyncpa [#allocation6], 1
    %92 = vsyncpa [#allocation4], 1

</llo_original>
